<compile_context>
chip_gen: v6e
topology: v6e:2x2x1
jax: 0.10.0
libtpu: 0.0.40
codegen_flags: <defaults>
</compile_context>

<pallas_src>
import functools

import jax
import jax.numpy as jnp
from jax import lax
from jax.experimental import pallas as pl
from jax.experimental.pallas import tpu as pltpu

MARGIN = 0.3                      # margin != 0.0 -> MarginRankingLoss branch
_BIG = 1e30                       # sentinel for masked max/min (squared-distance surrogate)
_PAD_LABEL = jnp.iinfo(jnp.int32).min   # real labels must never equal this
_RESIDENT_SLAB_BYTES = 8 * 1024 * 1024  # column-feature slab budget for the resident path
_RESIDENT_MAX_ROWS = 4096               # keep (n_pad, tm) intermediates bounded


def _triplet_kernel(xr_ref, xc_ref, tr_ref, tc_ref, rsq_ref, csqh_ref,
                    o_ref, ap_acc, an_acc, *, margin):
    # xr_ref  : (tm, d)   anchor-row feature tile (native dtype)
    # xc_ref  : (tn, d)   column feature tile     (native dtype; resident if tn == n_pad)
    # tr_ref  : (1, tm)   int32 anchor labels (anchors on the lane axis)
    # tc_ref  : (tn, 1)   int32 column labels
    # rsq_ref : (1, tm)   f32 ||x_i||^2 for anchors
    # csqh_ref: (tn, 1)   f32 0.5*||x_j||^2 for columns (+BIG for padded columns)
    # o_ref   : (1, tm)   f32 per-anchor loss, lane-dense (written at the last col tile)
    # ap_acc / an_acc : (1, tm) running max/min of the surrogate (0.5*||x_j||^2 - <x_i,x_j>)
    j = pl.program_id(1)

    @pl.when(j == 0)
    def _():
        ap_acc[...] = jnp.full_like(ap_acc, -_BIG)
        an_acc[...] = jnp.full_like(an_acc, _BIG)

    # Gram block on the MXU in the input dtype, f32 accumulation.
    # Shape (tn, tm): anchors live on the lane axis -> sublane reductions and
    # a lane-dense output, no transposes anywhere in the kernel.
    gram = lax.dot_general(
        xc_ref[...], xr_ref[...],
        dimension_numbers=(((1,), (1,)), ((), ())),       # xc @ xr.T
        preferred_element_type=jnp.float32)               # (tn, tm)

    # Monotone surrogate of the squared distance: the per-anchor constant
    # ||x_i||^2 and the global 2x scale cannot change the column-wise
    # argmax/argmin, so they are applied only at finalize on (1, tm) vectors.
    half = csqh_ref[...] - gram                           # (tn,1) - (tn,tm)
    same = tc_ref[...] == tr_ref[...]                     # (tn, tm) bool

    pos = jnp.where(same, half, -_BIG)                    # hardest positive candidates
    neg = jnp.where(same, _BIG, half)                     # hardest negative candidates

    ap_acc[...] = jnp.maximum(ap_acc[...], jnp.max(pos, axis=0, keepdims=True))
    an_acc[...] = jnp.minimum(an_acc[...], jnp.min(neg, axis=0, keepdims=True))

    @pl.when(j == pl.num_programs(1) - 1)
    def _():
        # Reconstruct squared distances, clamp(min=1e-12), sqrt — only on the
        # two (1, tm) reduced vectors (monotone, so selection is unchanged).
        d2_ap = rsq_ref[...] + 2.0 * ap_acc[...]
        d2_an = rsq_ref[...] + 2.0 * an_acc[...]
        dist_ap = jnp.sqrt(jnp.maximum(d2_ap, 1e-12))
        dist_an = jnp.sqrt(jnp.maximum(d2_an, 1e-12))
        if margin == 0.0:
            # SoftMarginLoss(dist_an - dist_ap, y=1) = log(1 + exp(-(an - ap)))
            per = jnp.log1p(jnp.exp(-(dist_an - dist_ap)))
        else:
            # MarginRankingLoss(margin)(dist_an, dist_ap, y=1)
            per = jnp.maximum(dist_ap - dist_an + jnp.float32(margin), 0.0)
        o_ref[...] = per


def _round_up(x, m):
    return ((x + m - 1) // m) * m


def _choose_tiles(n, d, itemsize):
    """Returns (tm, tn, n_pad). tn == n_pad means the column slab is VMEM-resident."""
    n8 = _round_up(max(n, 8), 8)
    slab_bytes = n8 * d * itemsize
    if n8 <= _RESIDENT_MAX_ROWS and slab_bytes <= _RESIDENT_SLAB_BYTES:
        # Columns resident: fetched once (column block index constant over the grid).
        # tm=128 keeps >=2 row tiles for n_pad>=256 so v7x's two TCs both get work.
        tm = 128 if n8 >= 256 else n8
        n_pad = _round_up(n, tm)
        tn = n_pad
    elif n8 < 256:
        tm = tn = n_pad = n8                      # huge d, tiny batch: single tile
    elif n8 < 512:
        n_pad = _round_up(n, 256)
        tm, tn = n_pad, 256
    else:
        # Streaming columns: big row tile lifts FLOPs per streamed column byte
        # past the HBM roofline; shrink tm only when per-row bytes are huge.
        tm = 512 if d * itemsize <= 8192 else 256
        tn = 256
        n_pad = _round_up(n, tm)                  # tm is a multiple of tn
    return tm, tn, n_pad
    # TODO(synk): pathological d (> ~16K f32) would also want a K-split over the
    # feature dim with a gram accumulator; not needed for re-ID feature sizes.


def triplet_loss(inputs, targets, margin=MARGIN):
    """inputs: (n, d) float array; targets: (n,) int labels (must be != INT32_MIN).
    Returns scalar f32 batch-hard triplet loss."""
    n, d = inputs.shape
    itemsize = jnp.dtype(inputs.dtype).itemsize
    tm, tn, n_pad = _choose_tiles(n, d, itemsize)
    pad = n_pad - n

    x = inputs
    t = targets.astype(jnp.int32)
    if pad:
        x = jnp.pad(x, ((0, pad), (0, 0)))
        t = jnp.pad(t, (0, pad), constant_values=_PAD_LABEL)

    # Squared row norms in f32, pre-laid-out for both orientations (no in-kernel
    # transposes).  Padded columns get +BIG half-norms so they can never be the
    # hardest negative; padded labels (INT32_MIN) can never be positives.
    x32 = x.astype(jnp.float32)
    sq = jnp.sum(x32 * x32, axis=1)               # (n_pad,)
    rsq = sq.reshape(1, n_pad)                    # anchor ||x||^2, lane-major
    csq_half = 0.5 * sq
    if pad:
        csq_half = csq_half.at[n:].set(_BIG)
    csq_half = csq_half.reshape(n_pad, 1)
    t_row = t.reshape(1, n_pad)                   # anchor labels (lane-major)
    t_col = t.reshape(n_pad, 1)                   # column labels

    grid = (n_pad // tm, n_pad // tn)
    kernel = functools.partial(_triplet_kernel, margin=float(margin))

    # Explicit VMEM budget for the chosen tiles (double-buffered feature tiles +
    # (tn, tm) intermediates + headroom), capped below v7x's 64 MiB physical.
    vmem_limit = int(2 * tm * d * itemsize        # anchor tiles (double-buffered)
                     + 2 * tn * d * itemsize      # column tiles (resident: DMA'd once)
                     + 8 * tm * tn * 4            # gram / mask / select intermediates
                     + 4 * 1024 * 1024)           # labels, norms, accumulators, output
    vmem_limit = max(vmem_limit, 32 * 1024 * 1024)
    vmem_limit = min(vmem_limit, 56 * 1024 * 1024)

    per_anchor = pl.pallas_call(
        kernel,
        out_shape=jax.ShapeDtypeStruct((1, n_pad), jnp.float32),
        grid_spec=pltpu.PrefetchScalarGridSpec(
            num_scalar_prefetch=0,
            grid=grid,
            in_specs=[
                pl.BlockSpec((tm, d), lambda i, j: (i, 0)),   # anchor features
                pl.BlockSpec((tn, d), lambda i, j: (j, 0)),   # column features
                pl.BlockSpec((1, tm), lambda i, j: (0, i)),   # anchor labels
                pl.BlockSpec((tn, 1), lambda i, j: (j, 0)),   # column labels
                pl.BlockSpec((1, tm), lambda i, j: (0, i)),   # anchor ||x||^2
                pl.BlockSpec((tn, 1), lambda i, j: (j, 0)),   # 0.5*||x||^2 cols (+BIG pads)
            ],
            out_specs=pl.BlockSpec((1, tm), lambda i, j: (0, i)),   # lane-dense loss
            scratch_shapes=[
                pltpu.VMEM((1, tm), jnp.float32),   # running max (positives surrogate)
                pltpu.VMEM((1, tm), jnp.float32),   # running min (negatives surrogate)
            ],
        ),
        compiler_params=pltpu.CompilerParams(
            dimension_semantics=("parallel", "arbitrary"),
            vmem_limit_bytes=vmem_limit),
    )(x, x, t_row, t_col, rsq, csq_half)

    # Final mean over the TRUE anchor count n (padded lanes excluded).
    return jnp.mean(per_anchor[0, :n])
    # TODO(synk): mutual_flag=True (returning the full dist matrix) is not
    # implemented; the module's default forward returns only the scalar loss.


def _triplet_loss_ref(inputs, targets, margin=MARGIN):
    """Pure-JAX reference mirroring the PyTorch forward."""
    x = inputs.astype(jnp.float32)
    sq = jnp.sum(x * x, axis=1, keepdims=True)
    dist = jnp.sqrt(jnp.maximum(sq + sq.T - 2.0 * (x @ x.T), 1e-12))
    mask = targets[:, None] == targets[None, :]
    dist_ap = jnp.max(jnp.where(mask, dist, -jnp.inf), axis=1)
    dist_an = jnp.min(jnp.where(mask, jnp.inf, dist), axis=1)
    if margin == 0.0:
        return jnp.mean(jnp.log1p(jnp.exp(-(dist_an - dist_ap))))
    return jnp.mean(jnp.maximum(dist_ap - dist_an + margin, 0.0))


if __name__ == "__main__":
    key = jax.random.PRNGKey(0)

    # Case 1: batch_size=8, feat_dim=32; 4 identities x 2 samples each.
    n, d = 8, 32
    feats = jax.random.normal(key, (n, d), dtype=jnp.float32)
    labels = jnp.array([0, 0, 1, 1, 2, 2, 3, 3], dtype=jnp.int32)
    loss = jax.block_until_ready(triplet_loss(feats, labels))
    ref = jax.block_until_ready(_triplet_loss_ref(feats, labels))
    assert jnp.allclose(loss, ref, atol=1e-5, rtol=1e-4), (loss, ref)

    # Case 2: exercises the batch-padding path (n=12 -> 16 padded rows/columns).
    n2, d2 = 12, 32
    feats2 = jax.random.normal(jax.random.PRNGKey(1), (n2, d2), dtype=jnp.float32)
    labels2 = jnp.array([0, 0, 0, 1, 1, 1, 2, 2, 2, 3, 3, 3], dtype=jnp.int32)
    loss2 = jax.block_until_ready(triplet_loss(feats2, labels2))
    ref2 = jax.block_until_ready(_triplet_loss_ref(feats2, labels2))
    assert jnp.allclose(loss2, ref2, atol=1e-5, rtol=1e-4), (loss2, ref2)

    print("KERNEL_OK")
</pallas_src>

<mosaic_0001>
module attributes {stable_mosaic.version = 11 : i64} {
  func.func @_triplet_kernel(%arg0: i32, %arg1: i32, %arg2: memref<8x32xf32, #tpu.memory_space<vmem>>, %arg3: memref<8x32xf32, #tpu.memory_space<vmem>>, %arg4: memref<1x8xi32, #tpu.memory_space<vmem>>, %arg5: memref<8x1xi32, #tpu.memory_space<vmem>>, %arg6: memref<1x8xf32, #tpu.memory_space<vmem>>, %arg7: memref<8x1xf32, #tpu.memory_space<vmem>>, %arg8: memref<1x8xf32, #tpu.memory_space<vmem>>, %arg9: memref<1x8xf32, #tpu.memory_space<vmem>>, %arg10: memref<1x8xf32, #tpu.memory_space<vmem>>) attributes {dimension_semantics = [#tpu.dimension_semantics<parallel>, #tpu.dimension_semantics<arbitrary>], iteration_bounds = array<i64: 1, 1>, scalar_prefetch = 0 : i64, scratch_operands = 2 : i64, tpu.core_type = #tpu.core_type<tc>, window_params = [{transform_indices = @transform_0, window_bounds = array<i64: 8, 32>}, {transform_indices = @transform_1, window_bounds = array<i64: 8, 32>}, {transform_indices = @transform_2, window_bounds = array<i64: 1, 8>}, {transform_indices = @transform_3, window_bounds = array<i64: 8, 1>}, {transform_indices = @transform_4, window_bounds = array<i64: 1, 8>}, {transform_indices = @transform_5, window_bounds = array<i64: 8, 1>}, {transform_indices = @transform_6, window_bounds = array<i64: 1, 8>}]} {
    %c0_i32 = arith.constant 0 : i32
    %0 = arith.cmpi eq, %arg1, %c0_i32 : i32
    %1 = arith.extui %0 : i1 to i32
    %c0_i32_0 = arith.constant 0 : i32
    %2 = arith.cmpi ne, %1, %c0_i32_0 : i32
    scf.if %2 {
      %cst_24 = arith.constant -1.000000e+30 : f32
      %31 = vector.broadcast %cst_24 : f32 to vector<1x8xf32>
      %c0_25 = arith.constant 0 : index
      %c0_26 = arith.constant 0 : index
      %32 = vector.load %arg9[%c0_25, %c0_26] : memref<1x8xf32, #tpu.memory_space<vmem>>, vector<1x8xf32>
      tpu.vector_store %arg9[%c0_25, %c0_26], %31 {strides = array<i32>} : memref<1x8xf32, #tpu.memory_space<vmem>>, vector<1x8xf32>,
      %cst_27 = arith.constant 1.000000e+30 : f32
      %33 = vector.broadcast %cst_27 : f32 to vector<1x8xf32>
      %c0_28 = arith.constant 0 : index
      %c0_29 = arith.constant 0 : index
      %34 = vector.load %arg10[%c0_28, %c0_29] : memref<1x8xf32, #tpu.memory_space<vmem>>, vector<1x8xf32>
      tpu.vector_store %arg10[%c0_28, %c0_29], %33 {strides = array<i32>} : memref<1x8xf32, #tpu.memory_space<vmem>>, vector<1x8xf32>,
    } else {
    }
    %c0 = arith.constant 0 : index
    %c0_1 = arith.constant 0 : index
    %3 = vector.load %arg3[%c0, %c0_1] : memref<8x32xf32, #tpu.memory_space<vmem>>, vector<8x32xf32>
    %c0_2 = arith.constant 0 : index
    %c0_3 = arith.constant 0 : index
    %4 = vector.load %arg2[%c0_2, %c0_3] : memref<8x32xf32, #tpu.memory_space<vmem>>, vector<8x32xf32>
    %cst = arith.constant dense<0.000000e+00> : vector<8x8xf32>
    %5 = tpu.matmul %3, %4, %cst {dimension_numbers = #tpu.dot_dimension_numbers<[1], [1], [0], [0], [0, 0, 1, 0], [], []>} : vector<8x32xf32>, vector<8x32xf32>, vector<8x8xf32> -> vector<8x8xf32>
    %c0_4 = arith.constant 0 : index
    %c0_5 = arith.constant 0 : index
    %6 = vector.load %arg7[%c0_4, %c0_5] : memref<8x1xf32, #tpu.memory_space<vmem>>, vector<8x1xf32>
    %7 = vector.broadcast %6 : vector<8x1xf32> to vector<8x8xf32>
    %8 = arith.subf %7, %5 : vector<8x8xf32>
    %c0_6 = arith.constant 0 : index
    %c0_7 = arith.constant 0 : index
    %9 = vector.load %arg5[%c0_6, %c0_7] : memref<8x1xi32, #tpu.memory_space<vmem>>, vector<8x1xi32>
    %c0_8 = arith.constant 0 : index
    %c0_9 = arith.constant 0 : index
    %10 = vector.load %arg4[%c0_8, %c0_9] : memref<1x8xi32, #tpu.memory_space<vmem>>, vector<1x8xi32>
    %11 = vector.broadcast %9 : vector<8x1xi32> to vector<8x8xi32>
    %12 = vector.broadcast %10 : vector<1x8xi32> to vector<8x8xi32>
    %13 = arith.cmpi eq, %11, %12 : vector<8x8xi32>
    %cst_10 = arith.constant -1.000000e+30 : f32
    %14 = vector.broadcast %cst_10 : f32 to vector<8x8xf32>
    %15 = arith.select %13, %8, %14 : vector<8x8xi1>, vector<8x8xf32>
    %cst_11 = arith.constant 1.000000e+30 : f32
    %16 = vector.broadcast %cst_11 : f32 to vector<8x8xf32>
    %17 = arith.select %13, %16, %8 : vector<8x8xi1>, vector<8x8xf32>
    %c0_12 = arith.constant 0 : index
    %c0_13 = arith.constant 0 : index
    %18 = vector.load %arg9[%c0_12, %c0_13] : memref<1x8xf32, #tpu.memory_space<vmem>>, vector<1x8xf32>
    %cst_14 = arith.constant dense<0xFF800000> : vector<8xf32>
    %19 = vector.multi_reduction <maximumf>, %15, %cst_14 [0] : vector<8x8xf32> to vector<8xf32>
    %20 = vector.shape_cast %19 : vector<8xf32> to vector<1x8xf32>
    %21 = arith.maximumf %18, %20 : vector<1x8xf32>
    %c0_15 = arith.constant 0 : index
    %c0_16 = arith.constant 0 : index
    %22 = vector.load %arg9[%c0_15, %c0_16] : memref<1x8xf32, #tpu.memory_space<vmem>>, vector<1x8xf32>
    tpu.vector_store %arg9[%c0_15, %c0_16], %21 {strides = array<i32>} : memref<1x8xf32, #tpu.memory_space<vmem>>, vector<1x8xf32>,
    %c0_17 = arith.constant 0 : index
    %c0_18 = arith.constant 0 : index
    %23 = vector.load %arg10[%c0_17, %c0_18] : memref<1x8xf32, #tpu.memory_space<vmem>>, vector<1x8xf32>
    %cst_19 = arith.constant dense<0x7F800000> : vector<8xf32>
    %24 = vector.multi_reduction <minimumf>, %17, %cst_19 [0] : vector<8x8xf32> to vector<8xf32>
    %25 = vector.shape_cast %24 : vector<8xf32> to vector<1x8xf32>
    %26 = arith.minimumf %23, %25 : vector<1x8xf32>
    %c0_20 = arith.constant 0 : index
    %c0_21 = arith.constant 0 : index
    %27 = vector.load %arg10[%c0_20, %c0_21] : memref<1x8xf32, #tpu.memory_space<vmem>>, vector<1x8xf32>
    tpu.vector_store %arg10[%c0_20, %c0_21], %26 {strides = array<i32>} : memref<1x8xf32, #tpu.memory_space<vmem>>, vector<1x8xf32>,
    %c0_i32_22 = arith.constant 0 : i32
    %28 = arith.cmpi eq, %arg1, %c0_i32_22 : i32
    %29 = arith.extui %28 : i1 to i32
    %c0_i32_23 = arith.constant 0 : i32
    %30 = arith.cmpi ne, %29, %c0_i32_23 : i32
    scf.if %30 {
      %c0_24 = arith.constant 0 : index
      %c0_25 = arith.constant 0 : index
      %31 = vector.load %arg6[%c0_24, %c0_25] : memref<1x8xf32, #tpu.memory_space<vmem>>, vector<1x8xf32>
      %c0_26 = arith.constant 0 : index
      %c0_27 = arith.constant 0 : index
      %32 = vector.load %arg9[%c0_26, %c0_27] : memref<1x8xf32, #tpu.memory_space<vmem>>, vector<1x8xf32>
      %cst_28 = arith.constant 2.000000e+00 : f32
      %33 = vector.broadcast %cst_28 : f32 to vector<1x8xf32>
      %34 = arith.mulf %33, %32 : vector<1x8xf32>
      %35 = arith.addf %31, %34 : vector<1x8xf32>
      %c0_29 = arith.constant 0 : index
      %c0_30 = arith.constant 0 : index
      %36 = vector.load %arg6[%c0_29, %c0_30] : memref<1x8xf32, #tpu.memory_space<vmem>>, vector<1x8xf32>
      %c0_31 = arith.constant 0 : index
      %c0_32 = arith.constant 0 : index
      %37 = vector.load %arg10[%c0_31, %c0_32] : memref<1x8xf32, #tpu.memory_space<vmem>>, vector<1x8xf32>
      %cst_33 = arith.constant 2.000000e+00 : f32
      %38 = vector.broadcast %cst_33 : f32 to vector<1x8xf32>
      %39 = arith.mulf %38, %37 : vector<1x8xf32>
      %40 = arith.addf %36, %39 : vector<1x8xf32>
      %cst_34 = arith.constant 9.99999996E-13 : f32
      %41 = vector.broadcast %cst_34 : f32 to vector<1x8xf32>
      %42 = arith.maximumf %35, %41 : vector<1x8xf32>
      %43 = math.sqrt %42 : vector<1x8xf32>
      %cst_35 = arith.constant 9.99999996E-13 : f32
      %44 = vector.broadcast %cst_35 : f32 to vector<1x8xf32>
      %45 = arith.maximumf %40, %44 : vector<1x8xf32>
      %46 = math.sqrt %45 : vector<1x8xf32>
      %47 = arith.subf %43, %46 : vector<1x8xf32>
      %cst_36 = arith.constant 3.000000e-01 : f32
      %48 = vector.broadcast %cst_36 : f32 to vector<1x8xf32>
      %49 = arith.addf %47, %48 : vector<1x8xf32>
      %cst_37 = arith.constant 0.000000e+00 : f32
      %50 = vector.broadcast %cst_37 : f32 to vector<1x8xf32>
      %51 = arith.maximumf %49, %50 : vector<1x8xf32>
      %c0_38 = arith.constant 0 : index
      %c0_39 = arith.constant 0 : index
      %52 = vector.load %arg8[%c0_38, %c0_39] : memref<1x8xf32, #tpu.memory_space<vmem>>, vector<1x8xf32>
      tpu.vector_store %arg8[%c0_38, %c0_39], %51 {strides = array<i32>} : memref<1x8xf32, #tpu.memory_space<vmem>>, vector<1x8xf32>,
    } else {
    }
    return
  }
  func.func @transform_0(%arg0: i32, %arg1: i32) -> (i32, i32) {
    %c0_i32 = arith.constant 0 : i32
    %c0_i32_0 = arith.constant 0 : i32
    return %arg0, %c0_i32 : i32, i32
  }
  func.func @transform_1(%arg0: i32, %arg1: i32) -> (i32, i32) {
    %c0_i32 = arith.constant 0 : i32
    %c0_i32_0 = arith.constant 0 : i32
    return %arg1, %c0_i32 : i32, i32
  }
  func.func @transform_2(%arg0: i32, %arg1: i32) -> (i32, i32) {
    %c0_i32 = arith.constant 0 : i32
    %c0_i32_0 = arith.constant 0 : i32
    return %c0_i32, %arg0 : i32, i32
  }
  func.func @transform_3(%arg0: i32, %arg1: i32) -> (i32, i32) {
    %c0_i32 = arith.constant 0 : i32
    %c0_i32_0 = arith.constant 0 : i32
    return %arg1, %c0_i32 : i32, i32
  }
  func.func @transform_4(%arg0: i32, %arg1: i32) -> (i32, i32) {
    %c0_i32 = arith.constant 0 : i32
    %c0_i32_0 = arith.constant 0 : i32
    return %c0_i32, %arg0 : i32, i32
  }
  func.func @transform_5(%arg0: i32, %arg1: i32) -> (i32, i32) {
    %c0_i32 = arith.constant 0 : i32
    %c0_i32_0 = arith.constant 0 : i32
    return %arg1, %c0_i32 : i32, i32
  }
  func.func @transform_6(%arg0: i32, %arg1: i32) -> (i32, i32) {
    %c0_i32 = arith.constant 0 : i32
    %c0_i32_0 = arith.constant 0 : i32
    return %c0_i32, %arg0 : i32, i32
  }
}

</mosaic_0001>

<llo_original>
// kernel: tpu_custom_call.1
$region0: #{tpu_custom_call.1}
  #allocation0 [shape = 'u32[]', space=smem, size = 0x4, offset = 0x4, fixed_abs, tag = 'smem constant byte address 0x4 - core index']
  #allocation1 [shape = 'u32[144,128]{1,0:T(1,128)}', space=vmem, size = 0x12000, scoped, tag = 'internal scratch']
  #allocation2 [shape = 'f32[1,8]{1,0:T(1,128)}', space=vmem, size = 0x200, scoped, tag = 'scratch operand']
  #allocation3 [shape = 'f32[1,8]{1,0:T(1,128)}', space=vmem, size = 0x200, scoped, tag = 'scratch operand']
  %s0 = inlined_call_operand.vmem [shape: f32[8,32], index: 0, kind: input, shape index: {}]
  %s1 = inlined_call_operand.vmem [shape: f32[8,32], index: 1, kind: input, shape index: {}]
  %s2 = inlined_call_operand.vmem [shape: s32[1,8], index: 2, kind: input, shape index: {}]
  %s3 = inlined_call_operand.vmem [shape: s32[8,1], index: 3, kind: input, shape index: {}]
  %s4 = inlined_call_operand.vmem [shape: f32[1,8], index: 4, kind: input, shape index: {}]
  %s5 = inlined_call_operand.vmem [shape: f32[8,1], index: 5, kind: input, shape index: {}]
  %s6 = inlined_call_operand.hbm [shape: f32[1,8], index: 6, kind: output, shape index: {}]
  %s7 = sld [smem:[#allocation0]]
  $region42: #{tpu_custom_call.1} parent=0
    _
  %s9 = ssub.s32 1, %s7
  %s10 = scalar_select 0, %s9, %s7
  $region1: #{tpu_custom_call.1} parent=0
    #allocation4 [shape = 'u8[512]{0}', space=vmem, size = 0x400, scoped, tag = 'output window, operand 0, single buffered']
    #allocation5 [shape = 's32[1]{0}', space=sflag, size = 0x4, scoped, tag = 'scoped memory for tpu_custom_call.1']
    %11 = vsyncpa [#allocation5], 0
    // Predicated region
    $region2: #{tpu_custom_call.1} parent=1 // pred_check
      _
    $region3: #{tpu_custom_call.1} parent=1 // pred_check_branch
      %13 = sbr.rel (0) target = $region5
    $region4: #{tpu_custom_call.1} parent=1 // pred_region
      _
    $region5: #{tpu_custom_call.1} parent=1 // pred_fallthru
      _
    // Predicated region
    $region6: #{tpu_custom_call.1} parent=1 // pred_check
      _
    $region7: #{tpu_custom_call.1} parent=1 // pred_check_branch
      %15 = sbr.rel (0) target = $region9
    $region8: #{tpu_custom_call.1} parent=1 // pred_region
      _
    $region9: #{tpu_custom_call.1} parent=1 // pred_fallthru
      _
    // Predicated region
    $region10: #{tpu_custom_call.1} parent=1 // pred_check
      _
    $region11: #{tpu_custom_call.1} parent=1 // pred_check_branch
      %17 = sbr.rel (0) target = $region13
    $region12: #{tpu_custom_call.1} parent=1 // pred_region
      _
    $region13: #{tpu_custom_call.1} parent=1 // pred_fallthru
      _
    // Predicated region
    $region14: #{tpu_custom_call.1} parent=1 // pred_check
      _
    $region15: #{tpu_custom_call.1} parent=1 // pred_check_branch
      %19 = sbr.rel (0) target = $region17
    $region16: #{tpu_custom_call.1} parent=1 // pred_region
      _
    $region17: #{tpu_custom_call.1} parent=1 // pred_fallthru
      _
    // Predicated region
    $region18: #{tpu_custom_call.1} parent=1 // pred_check
      _
    $region19: #{tpu_custom_call.1} parent=1 // pred_check_branch
      %21 = sbr.rel (0) target = $region21
    $region20: #{tpu_custom_call.1} parent=1 // pred_region
      _
    $region21: #{tpu_custom_call.1} parent=1 // pred_fallthru
      _
    // Predicated region
    $region22: #{tpu_custom_call.1} parent=1 // pred_check
      _
    $region23: #{tpu_custom_call.1} parent=1 // pred_check_branch
      %23 = sbr.rel (0) target = $region25
    $region24: #{tpu_custom_call.1} parent=1 // pred_region
      _
    $region25: #{tpu_custom_call.1} parent=1 // pred_fallthru
      _
    %p24 = scmp.eq.s32.totalorder 0, 0
    // Predicated region
    $region26: #{tpu_custom_call.1} parent=1 // pred_check
      %p25 = pneg %p24
    $region27: #{tpu_custom_call.1} parent=1 // pred_check_branch
      %27 = sbr.rel (%p25) target = $region29
    $region28: #{tpu_custom_call.1} parent=1 // pred_region
      %vm28 = vcmask 57344
      %29 = vst.msk [vmem:[#allocation2] sm:$0x1] %vm28, -1e+30
      %30 = vst.msk [vmem:[#allocation3] sm:$0x1] %vm28, 1e+30
    $region29: #{tpu_custom_call.1} parent=1 // pred_fallthru
      _
    %v31 = vld [vmem:[%s1] sm:$0xff]
    %v32 = vld [vmem:[%s0] sm:$0xff]
    %vm33 = vcmask 261120
    %v35 = vsel %vm33, %v31, 0
    %v38 = vsel %vm33, %v32, 0
    %40 = vmatprep.subr.mxu0 0.0
    %41 = vmatpush1.xpose.msra.mxu0 0.0
    %42 = vmatprep.subr.mxu0 0.0
    %43 = vmatpush1.xpose.msra.mxu0 0.0
    %44 = vmatprep.subr.mxu0 0.0
    %45 = vmatpush1.xpose.msra.mxu0 0.0
    %46 = vmatprep.subr.mxu0 0.0
    %47 = vmatpush1.xpose.msra.mxu0 0.0
    %48 = vmatprep.subr.mxu0 0.0
    %49 = vmatpush1.xpose.msra.mxu0 0.0
    %50 = vmatprep.subr.mxu0 0.0
    %51 = vmatpush1.xpose.msra.mxu0 0.0
    %52 = vmatprep.subr.mxu0 0.0
    %53 = vmatpush1.xpose.msra.mxu0 0.0
    %54 = vmatprep.subr.mxu0 0.0
    %55 = vmatpush1.xpose.msra.mxu0 0.0
    %56 = vmatprep.subr.mxu0 0.0
    %57 = vmatpush1.xpose.msra.mxu0 0.0
    %58 = vmatprep.subr.mxu0 0.0
    %59 = vmatpush1.xpose.msra.mxu0 0.0
    %60 = vmatprep.subr.mxu0 0.0
    %61 = vmatpush1.xpose.msra.mxu0 0.0
    %62 = vmatprep.subr.mxu0 0.0
    %63 = vmatpush1.xpose.msra.mxu0 0.0
    %64 = vmatprep.subr.mxu0 0.0
    %65 = vmatpush1.xpose.msra.mxu0 0.0
    %66 = vmatprep.subr.mxu0 0.0
    %67 = vmatpush1.xpose.msra.mxu0 0.0
    %68 = vmatprep.subr.mxu0 0.0
    %69 = vmatpush1.xpose.msra.mxu0 0.0
    %70 = vmatprep.subr.mxu0 0.0
    %71 = vmatpush1.xpose.msra.mxu0 %v38
    %72 = vmatprep.subr.mxu0 0.0
    %73 = vmatpush2.xpose.msra.mxu0 0.0
    %74 = vmatprep.subr.mxu0 0.0
    %75 = vmatpush2.xpose.msra.mxu0 0.0
    %76 = vmatprep.subr.mxu0 0.0
    %77 = vmatpush2.xpose.msra.mxu0 0.0
    %78 = vmatprep.subr.mxu0 0.0
    %79 = vmatpush2.xpose.msra.mxu0 0.0
    %80 = vmatprep.subr.mxu0 0.0
    %81 = vmatpush2.xpose.msra.mxu0 0.0
    %82 = vmatprep.subr.mxu0 0.0
    %83 = vmatpush2.xpose.msra.mxu0 0.0
    %84 = vmatprep.subr.mxu0 0.0
    %85 = vmatpush2.xpose.msra.mxu0 0.0
    %86 = vmatprep.subr.mxu0 0.0
    %87 = vmatpush2.xpose.msra.mxu0 0.0
    %88 = vmatprep.subr.mxu0 0.0
    %89 = vmatpush2.xpose.msra.mxu0 0.0
    %90 = vmatprep.subr.mxu0 0.0
    %91 = vmatpush2.xpose.msra.mxu0 0.0
    %92 = vmatprep.subr.mxu0 0.0
    %93 = vmatpush2.xpose.msra.mxu0 0.0
    %94 = vmatprep.subr.mxu0 0.0
    %95 = vmatpush2.xpose.msra.mxu0 0.0
    %96 = vmatprep.subr.mxu0 0.0
    %97 = vmatpush2.xpose.msra.mxu0 0.0
    %98 = vmatprep.subr.mxu0 0.0
    %99 = vmatpush2.xpose.msra.mxu0 0.0
    %100 = vmatprep.subr.mxu0 0.0
    %101 = vmatpush2.xpose.msra.mxu0 0.0
    %102 = vmatprep.subr.mxu0 0.0
    %103 = vmatpush2.xpose.msra.mxu0 0.0
    %104 = vmatprep.mubr.f32.mxu0 0.0
    %105 = vmatmul.mubr.f32.gmra.mxu0 %v35
    %v106 = vpop.f32.mrf.mxu0
    %v107 = vadd.f32 0.0, %v106
    %v108 = vpop.f32.mrf.mxu0
    %109 = vdwg.mxu0
    %v110 = vld [vmem:[%s5] sm:$0xff]
    %112 = vset.pattern.permute.xlu0 0
    %113 = vperm.xlu0 %112, %v110
    %v114 = vpop.permute.xlu0 %113
    %v116 = vsub.f32 %v114, %v107
    %v117 = vld [vmem:[%s3] sm:$0xff]
    %v118 = vld [vmem:[%s2] sm:$0x1]
    %119 = vset.pattern.permute.xlu0 0
    %120 = vperm.xlu0 %119, %v117
    %v121 = vpop.permute.xlu0 %120
    %v122 = vlaneseq
    %v123 = vshrl.u32 %v122, 7
    %v124 = vsub.s32 0, %v123
    %v125 = vrot.slane %v118, %v124
    %vm126 = vcmp.eq.s32.totalorder %v121, %v125
    %v127 = vsel %vm126, %v116, -1e+30
    %v128 = vsel %vm126, 1e+30, %v116
    %v129 = vld [vmem:[#allocation2] sm:$0x1]
    %vm130 = vcmask 64512
    %v131 = vsel %vm130, %v127, -inf
    %v132 = vrot.slane %v131, 4
    %v133 = vmax.f32 %v131, %v132
    %v134 = vrot.slane %v133, 2
    %v135 = vmax.f32 %v133, %v134
    %v136 = vrot.slane %v135, 1
    %v137 = vmax.f32 %v135, %v136
    %v138 = vmax.f32 %v129, %v137
    %vm139 = vcmask 57344
    %140 = vst.msk [vmem:[#allocation2] sm:$0x1] %vm139, %v138
    %v141 = vld [vmem:[#allocation3] sm:$0x1]
    %v142 = vsel %vm130, %v128, inf
    %v143 = vrot.slane %v142, 4
    %v144 = vmin.f32 %v142, %v143
    %v145 = vrot.slane %v144, 2
    %v146 = vmin.f32 %v144, %v145
    %v147 = vrot.slane %v146, 1
    %v148 = vmin.f32 %v146, %v147
    %v149 = vmin.f32 %v141, %v148
    %150 = vst.msk [vmem:[#allocation3] sm:$0x1] %vm139, %v149
    // Predicated region
    $region30: #{tpu_custom_call.1} parent=1 // pred_check
      %p151 = pneg %p24
    $region31: #{tpu_custom_call.1} parent=1 // pred_check_branch
      %153 = sbr.rel (%p151) target = $region33
    $region32: #{tpu_custom_call.1} parent=1 // pred_region
      %v154 = vld [vmem:[%s4] sm:$0x1]
      %v155 = vld [vmem:[#allocation2] sm:$0x1]
      %v156 = vmul.f32 %v155, 2.0
      %v157 = vadd.f32 %v154, %v156
      %v158 = vld [vmem:[#allocation3] sm:$0x1]
      %v159 = vmul.f32 %v158, 2.0
      %v160 = vadd.f32 %v154, %v159
      %v161 = vmax.f32 %v157, 1e-12
      %v162 = vrsqrt.pop %v161
      %v163 = vmul.f32 %v161, %v162
      %vm164 = vcmp.eq.f32.partialorder %v161, inf
      %v165 = vsel %vm164, %v161, %v163
      %vm166 = vcmp.eq.f32.partialorder %v161, 0.0
      %v167 = vand.u32 %v161, 2147483648
      %v168 = vsel %vm166, %v167, %v165
      %v169 = vmax.f32 %v160, 1e-12
      %v170 = vrsqrt.pop %v169
      %v171 = vmul.f32 %v169, %v170
      %vm172 = vcmp.eq.f32.partialorder %v169, inf
      %v173 = vsel %vm172, %v169, %v171
      %vm174 = vcmp.eq.f32.partialorder %v169, 0.0
      %v175 = vand.u32 %v169, 2147483648
      %v176 = vsel %vm174, %v175, %v173
      %v177 = vsub.f32 %v168, %v176
      %v178 = vadd.f32 %v177, 0.3
      %v179 = vmax.f32 %v178, 0.0
      %180 = vst.msk [vmem:[#allocation4] sm:$0x1] %vm139, %v179
    $region33: #{tpu_custom_call.1} parent=1 // pred_fallthru
      _
    // Predicated region
    $region34: #{tpu_custom_call.1} parent=1 // pred_check
      _
    $region35: #{tpu_custom_call.1} parent=1 // pred_check_branch
      %182 = sbr.rel (0) target = $region37
    $region36: #{tpu_custom_call.1} parent=1 // pred_region
      %s184 = ssub.s32 16, 16
      %185 = vsyncadd [#allocation5], %s184
      %s187 = sshll.u32 [#allocation4], 4
      %s188 = int_to_ptr.vmem [resolvable:$true] %s187
      %190 = dma.vmem_to_hbm [thread:$0]  %s188, 16, %s6, [#allocation5]
    $region37: #{tpu_custom_call.1} parent=1 // pred_fallthru
      _
    // Predicated region
    $region38: #{tpu_custom_call.1} parent=1 // pred_check
      _
    $region39: #{tpu_custom_call.1} parent=1 // pred_check_branch
      %192 = sbr.rel (0) target = $region41
    $region40: #{tpu_custom_call.1} parent=1 // pred_region
      %193 = dma.done [#allocation5], 16
    $region41: #{tpu_custom_call.1} parent=1 // pred_fallthru
      _
    %194 = vsyncpa [#allocation5], 1

</llo_original>
